<compile_context>
chip_gen: v5e
topology: v5e:2x2
jax: 0.10.0
libtpu: 0.0.40
codegen_flags: <defaults>
</compile_context>

<pallas_src>
import jax
import jax.numpy as jnp
from jax.experimental import pallas as pl
from jax.experimental.pallas import tpu as pltpu

DIM_STATE = 8      # LunarLanderContinuous-v2 observation dim
DIM_ACTION = 2     # LunarLanderContinuous-v2 action dim
DIM_INPUT = DIM_STATE + DIM_ACTION   # 10
DIM_INPUT_PAD = 16                   # K padded to 16 (zero rows/cols)
DIM_NN = 256 * 2                     # 512
LN_EPS = 1e-5                        # torch.nn.LayerNorm default eps


def _softplus(x):
    # torch.nn.functional.softplus with default threshold=20
    return jnp.where(x > 20.0, x, jnp.log1p(jnp.exp(jnp.minimum(x, 20.0))))


def _mish(x):
    return x * jnp.tanh(_softplus(x))


def _round_up(x, m):
    return ((x + m - 1) // m) * m


def critic_kernel(x_ref, w1_ref, pvec_ref, b2_ref, q_ref):
    # x_ref:   (bb, 16)  bf16   -- concat(state, action) zero-padded to K=16
    # w1_ref:  (16, 512) bf16   -- w1 zero-padded on the K axis
    # pvec_ref:(4, 512)  f32    -- rows = [b1, g1, be1, w2_row]
    # b2_ref:  (1,)      f32    -- SMEM scalar
    # q_ref:   (bb, 1)   f32    -- pre-LayerNorm(1) critic value
    b1 = pvec_ref[0:1, :]
    g1 = pvec_ref[1:2, :]
    be1 = pvec_ref[2:3, :]
    w2r = pvec_ref[3:4, :]

    # ---- Linear(10, 512): single bf16 MXU matmul, f32 accumulator ----
    h = jnp.dot(x_ref[...], w1_ref[...],
                preferred_element_type=jnp.float32) + b1       # (bb, 512) f32

    # ---- LayerNorm(512): one-pass stats (independent lane reductions) ----
    inv_n = 1.0 / DIM_NN
    s1 = jnp.sum(h, axis=-1, keepdims=True)
    s2 = jnp.sum(h * h, axis=-1, keepdims=True)
    mean1 = s1 * inv_n
    var1 = jnp.maximum(s2 * inv_n - mean1 * mean1, 0.0)
    h = (h - mean1) * jax.lax.rsqrt(var1 + LN_EPS)
    h = h * g1 + be1

    # ---- ReLU ----
    h = jnp.maximum(h, 0.0)

    # ---- Linear(512, 1) as VPU multiply + lane reduce (no N=1 MXU matmul) ----
    q = jnp.sum(h * w2r, axis=-1, keepdims=True) + b2_ref[0]   # (bb, 1)
    q_ref[...] = q.astype(q_ref.dtype)


def critic_forward(state, action, params, *, block_b=None, return_pre_ln=False):
    """CriticNet forward. state: (B, 8), action: (B, 2) -> (B, 1).

    The kernel produces q (pre-LayerNorm(1)); the degenerate LayerNorm(1)+Mish
    is applied in plain XLA (it is exactly Mish(be2) for every row).
    """
    B = state.shape[0]
    w1, b1, g1, be1, w2, b2, g2, be2 = params

    # ---- one-time param / input packing (hoist out of the hot path) ----
    # concat + zero-pad K to 16, cast to bf16 for the MXU.
    x = jnp.concatenate([state, action], axis=1)                      # (B, 10)
    xpad = jnp.pad(x, ((0, 0), (0, DIM_INPUT_PAD - DIM_INPUT)))
    xpad = xpad.astype(jnp.bfloat16)                                  # (B, 16)
    w1pad = jnp.pad(w1, ((0, DIM_INPUT_PAD - DIM_INPUT), (0, 0)))
    w1pad = w1pad.astype(jnp.bfloat16)                                # (16, 512)
    pvec = jnp.stack([b1, g1, be1, w2.reshape(DIM_NN)], axis=0)       # (4, 512)
    pvec = pvec.astype(jnp.float32)
    b2s = b2.reshape(1).astype(jnp.float32)                           # (1,) SMEM

    # ---- batch tiling: overhead / TC-sharding driven (VMEM is a non-issue) ----
    if block_b is None:
        if B <= 128:
            bb = B                                     # single grid step
        else:
            bb = min(_round_up(pl.cdiv(B, 2), 8), 1024)  # >=2 parallel tiles
    else:
        bb = min(block_b, B)
        if bb != B:
            bb = _round_up(bb, 8)
    grid = (pl.cdiv(B, bb),)

    q = pl.pallas_call(
        critic_kernel,
        grid=grid,
        out_shape=jax.ShapeDtypeStruct((B, 1), jnp.float32),
        in_specs=[
            pl.BlockSpec((bb, DIM_INPUT_PAD), lambda i: (i, 0)),        # x
            pl.BlockSpec((DIM_INPUT_PAD, DIM_NN), lambda i: (0, 0)),    # w1
            pl.BlockSpec((4, DIM_NN), lambda i: (0, 0)),                # packed
            pl.BlockSpec(memory_space=pltpu.MemorySpace.SMEM),          # b2
        ],
        out_specs=pl.BlockSpec((bb, 1), lambda i: (i, 0)),
        compiler_params=pltpu.CompilerParams(
            dimension_semantics=("parallel",)),
    )(xpad, w1pad, pvec, b2s)

    # ---- LayerNorm(1) + Mish in plain XLA (degenerate: y == be2 exactly) ----
    mean2 = jnp.mean(q, axis=-1, keepdims=True)
    d2 = q - mean2
    var2 = jnp.mean(d2 * d2, axis=-1, keepdims=True)
    y = d2 * jax.lax.rsqrt(var2 + LN_EPS) * g2 + be2
    out = _mish(y)

    if return_pre_ln:
        return out, q
    return out


def init_params(key):
    """Synthetic init mirroring the torch layer shapes.
    Linear: U(-1/sqrt(fan_in), 1/sqrt(fan_in)); LayerNorm: weight=1, bias=0."""
    k1, k2, k3, k4 = jax.random.split(key, 4)
    bound1 = 1.0 / jnp.sqrt(DIM_INPUT)
    w1 = jax.random.uniform(k1, (DIM_INPUT, DIM_NN), jnp.float32, -bound1, bound1)
    b1 = jax.random.uniform(k2, (DIM_NN,), jnp.float32, -bound1, bound1)
    g1 = jnp.ones((DIM_NN,), jnp.float32)
    be1 = jnp.zeros((DIM_NN,), jnp.float32)
    bound2 = 1.0 / jnp.sqrt(DIM_NN)
    w2 = jax.random.uniform(k3, (DIM_NN, 1), jnp.float32, -bound2, bound2)
    b2 = jax.random.uniform(k4, (1,), jnp.float32, -bound2, bound2)
    g2 = jnp.ones((1,), jnp.float32)
    be2 = jnp.zeros((1,), jnp.float32)
    return (w1, b1, g1, be1, w2, b2, g2, be2)


def critic_reference(state, action, params):
    """Pure-JAX f32 reference. Returns (module_output, pre-LayerNorm(1) q)."""
    w1, b1, g1, be1, w2, b2, g2, be2 = params
    hp = jax.lax.Precision.HIGHEST
    x = jnp.concatenate([state, action], axis=1)
    h = jnp.dot(x, w1, precision=hp) + b1
    m = h.mean(-1, keepdims=True)
    v = ((h - m) ** 2).mean(-1, keepdims=True)
    h = (h - m) / jnp.sqrt(v + LN_EPS) * g1 + be1
    h = jnp.maximum(h, 0.0)
    q = jnp.dot(h, w2, precision=hp) + b2
    m2 = q.mean(-1, keepdims=True)
    v2 = ((q - m2) ** 2).mean(-1, keepdims=True)
    y = (q - m2) / jnp.sqrt(v2 + LN_EPS) * g2 + be2
    out = y * jnp.tanh(_softplus(y))
    return out, q


if __name__ == "__main__":
    key = jax.random.PRNGKey(0)
    kp, ks, ka = jax.random.split(key, 3)

    B = 64  # small demo batch; single grid step
    params = init_params(kp)
    state = jax.random.normal(ks, (B, DIM_STATE), jnp.float32)
    action = jax.random.normal(ka, (B, DIM_ACTION), jnp.float32)

    out, q = critic_forward(state, action, params, return_pre_ln=True)
    out = jax.block_until_ready(out)
    q = jax.block_until_ready(q)

    ref_out, ref_q = critic_reference(state, action, params)
    assert out.shape == (B, 1), out.shape
    # Pre-LayerNorm(1) linear output: the meaningful numerical check.
    # Tolerance accounts for bf16 MXU operands in layer 1 (f32 accumulation).
    assert jnp.allclose(q, ref_q, atol=1e-2, rtol=1e-2), (q, ref_q)
    # Module output (LayerNorm(1) + Mish; degenerate -> Mish(be2) per row).
    assert jnp.allclose(out, ref_out, atol=1e-5, rtol=1e-5), (out, ref_out)

    print("KERNEL_OK")
</pallas_src>

<mosaic_0001>
module attributes {stable_mosaic.version = 11 : i64} {
  func.func @critic_kernel(%arg0: i32, %arg1: memref<64x16xbf16, #tpu.memory_space<vmem>>, %arg2: memref<16x512xbf16, #tpu.memory_space<vmem>>, %arg3: memref<4x512xf32, #tpu.memory_space<vmem>>, %arg4: memref<1xf32, #tpu.memory_space<smem>>, %arg5: memref<64x1xf32, #tpu.memory_space<vmem>>) attributes {dimension_semantics = [#tpu.dimension_semantics<parallel>], iteration_bounds = array<i64: 1>, scalar_prefetch = 0 : i64, scratch_operands = 0 : i64, tpu.core_type = #tpu.core_type<tc>, window_params = [{transform_indices = @transform_0, window_bounds = array<i64: 64, 16>}, {pipeline_mode = #tpu.pipeline_mode<synchronous>, transform_indices = @transform_1, window_bounds = array<i64: 16, 512>}, {pipeline_mode = #tpu.pipeline_mode<synchronous>, transform_indices = @transform_2, window_bounds = array<i64: 4, 512>}, {transform_indices = @transform_3, window_bounds = array<i64: 1>}, {transform_indices = @transform_4, window_bounds = array<i64: 64, 1>}]} {
    %c0 = arith.constant 0 : index
    %c0_0 = arith.constant 0 : index
    %0 = vector.load %arg3[%c0, %c0_0] : memref<4x512xf32, #tpu.memory_space<vmem>>, vector<1x512xf32>
    %c1 = arith.constant 1 : index
    %c0_1 = arith.constant 0 : index
    %1 = vector.load %arg3[%c1, %c0_1] : memref<4x512xf32, #tpu.memory_space<vmem>>, vector<1x512xf32>
    %c2 = arith.constant 2 : index
    %c0_2 = arith.constant 0 : index
    %2 = vector.load %arg3[%c2, %c0_2] : memref<4x512xf32, #tpu.memory_space<vmem>>, vector<1x512xf32>
    %c3 = arith.constant 3 : index
    %c0_3 = arith.constant 0 : index
    %3 = vector.load %arg3[%c3, %c0_3] : memref<4x512xf32, #tpu.memory_space<vmem>>, vector<1x512xf32>
    %c0_4 = arith.constant 0 : index
    %c0_5 = arith.constant 0 : index
    %4 = vector.load %arg1[%c0_4, %c0_5] : memref<64x16xbf16, #tpu.memory_space<vmem>>, vector<64x16xbf16>
    %c0_6 = arith.constant 0 : index
    %c0_7 = arith.constant 0 : index
    %5 = vector.load %arg2[%c0_6, %c0_7] : memref<16x512xbf16, #tpu.memory_space<vmem>>, vector<16x512xbf16>
    %cst = arith.constant dense<0.000000e+00> : vector<64x512xf32>
    %6 = tpu.matmul %4, %5, %cst {dimension_numbers = #tpu.dot_dimension_numbers<[1], [0], [0], [1], [0, 0, 1, 1], [], []>} : vector<64x16xbf16>, vector<16x512xbf16>, vector<64x512xf32> -> vector<64x512xf32>
    %7 = vector.broadcast %0 : vector<1x512xf32> to vector<64x512xf32>
    %8 = arith.addf %6, %7 : vector<64x512xf32>
    %cst_8 = arith.constant dense<0.000000e+00> : vector<64xf32>
    %9 = vector.multi_reduction <add>, %8, %cst_8 [1] : vector<64x512xf32> to vector<64xf32>
    %10 = vector.shape_cast %9 : vector<64xf32> to vector<64x1xf32>
    %11 = arith.mulf %8, %8 : vector<64x512xf32>
    %cst_9 = arith.constant dense<0.000000e+00> : vector<64xf32>
    %12 = vector.multi_reduction <add>, %11, %cst_9 [1] : vector<64x512xf32> to vector<64xf32>
    %13 = vector.shape_cast %12 : vector<64xf32> to vector<64x1xf32>
    %cst_10 = arith.constant 0.001953125 : f32
    %14 = vector.broadcast %cst_10 : f32 to vector<64x1xf32>
    %15 = arith.mulf %10, %14 : vector<64x1xf32>
    %cst_11 = arith.constant 0.001953125 : f32
    %16 = vector.broadcast %cst_11 : f32 to vector<64x1xf32>
    %17 = arith.mulf %13, %16 : vector<64x1xf32>
    %18 = arith.mulf %15, %15 : vector<64x1xf32>
    %19 = arith.subf %17, %18 : vector<64x1xf32>
    %cst_12 = arith.constant 0.000000e+00 : f32
    %20 = vector.broadcast %cst_12 : f32 to vector<64x1xf32>
    %21 = arith.maximumf %19, %20 : vector<64x1xf32>
    %22 = vector.broadcast %15 : vector<64x1xf32> to vector<64x512xf32>
    %23 = arith.subf %8, %22 : vector<64x512xf32>
    %cst_13 = arith.constant 9.99999974E-6 : f32
    %24 = vector.broadcast %cst_13 : f32 to vector<64x1xf32>
    %25 = arith.addf %21, %24 : vector<64x1xf32>
    %26 = math.rsqrt %25 : vector<64x1xf32>
    %27 = vector.broadcast %26 : vector<64x1xf32> to vector<64x512xf32>
    %28 = arith.mulf %23, %27 : vector<64x512xf32>
    %29 = vector.broadcast %1 : vector<1x512xf32> to vector<64x512xf32>
    %30 = arith.mulf %28, %29 : vector<64x512xf32>
    %31 = vector.broadcast %2 : vector<1x512xf32> to vector<64x512xf32>
    %32 = arith.addf %30, %31 : vector<64x512xf32>
    %cst_14 = arith.constant 0.000000e+00 : f32
    %33 = vector.broadcast %cst_14 : f32 to vector<64x512xf32>
    %34 = arith.maximumf %32, %33 : vector<64x512xf32>
    %35 = vector.broadcast %3 : vector<1x512xf32> to vector<64x512xf32>
    %36 = arith.mulf %34, %35 : vector<64x512xf32>
    %cst_15 = arith.constant dense<0.000000e+00> : vector<64xf32>
    %37 = vector.multi_reduction <add>, %36, %cst_15 [1] : vector<64x512xf32> to vector<64xf32>
    %38 = vector.shape_cast %37 : vector<64xf32> to vector<64x1xf32>
    %c0_16 = arith.constant 0 : index
    %39 = memref.load %arg4[%c0_16] : memref<1xf32, #tpu.memory_space<smem>>
    %40 = vector.broadcast %39 : f32 to vector<64x1xf32>
    %41 = arith.addf %38, %40 : vector<64x1xf32>
    %c0_17 = arith.constant 0 : index
    %c0_18 = arith.constant 0 : index
    %42 = vector.load %arg5[%c0_17, %c0_18] : memref<64x1xf32, #tpu.memory_space<vmem>>, vector<64x1xf32>
    tpu.vector_store %arg5[%c0_17, %c0_18], %41 {strides = array<i32>} : memref<64x1xf32, #tpu.memory_space<vmem>>, vector<64x1xf32>,
    return
  }
  func.func @transform_0(%arg0: i32) -> (i32, i32) {
    %c0_i32 = arith.constant 0 : i32
    %c0_i32_0 = arith.constant 0 : i32
    return %arg0, %c0_i32 : i32, i32
  }
  func.func @transform_1(%arg0: i32) -> (i32, i32) {
    %c0_i32 = arith.constant 0 : i32
    %c0_i32_0 = arith.constant 0 : i32
    %c0_i32_1 = arith.constant 0 : i32
    return %c0_i32, %c0_i32_0 : i32, i32
  }
  func.func @transform_2(%arg0: i32) -> (i32, i32) {
    %c0_i32 = arith.constant 0 : i32
    %c0_i32_0 = arith.constant 0 : i32
    %c0_i32_1 = arith.constant 0 : i32
    return %c0_i32, %c0_i32_0 : i32, i32
  }
  func.func @transform_3(%arg0: i32) -> i32 {
    %c0_i32 = arith.constant 0 : i32
    %c0_i32_0 = arith.constant 0 : i32
    return %c0_i32 : i32
  }
  func.func @transform_4(%arg0: i32) -> (i32, i32) {
    %c0_i32 = arith.constant 0 : i32
    %c0_i32_0 = arith.constant 0 : i32
    return %arg0, %c0_i32 : i32, i32
  }
}

</mosaic_0001>

<llo_original>
// kernel: tpu_custom_call.1
$region0: #{tpu_custom_call.1}
  #allocation0 [shape = 'u32[]', space=smem, size = 0x4, offset = 0x4, fixed_abs, tag = 'smem constant byte address 0x4 - core index']
  #allocation1 [shape = 'u32[72,128]{1,0:T(1,128)}', space=vmem, size = 0x9000, scoped, tag = 'internal scratch']
  #allocation2 [shape = 'f32[1]{0:T(128)S(6)}', space=smem, size = 0x200, scoped, tag = 'scoped memory for tpu_custom_call.1']
  %s0 = inlined_call_operand.vmem [shape: bf16[64,16], index: 0, kind: input, shape index: {}]
  %s1 = inlined_call_operand.vmem [shape: bf16[16,512], index: 1, kind: input, shape index: {}]
  %s2 = inlined_call_operand.hbm [shape: f32[4,512], index: 2, kind: input, shape index: {}]
  %s3 = inlined_call_operand.<no memory space> [shape: f32[1], index: 3, kind: input, shape index: {}]
  %s4 = inlined_call_operand.vmem [shape: f32[64,1], index: 4, kind: output, shape index: {}]
  %s5 = sld [smem:[#allocation0]]
  $region30: #{tpu_custom_call.1} parent=0
    _
  %s7 = ssub.s32 1, %s5
  %s8 = scalar_select 0, %s7, %s5
  %9 = sst [smem:[#allocation2]] %s3
  $region1: #{tpu_custom_call.1} parent=0
    #allocation3 [shape = 'u8[8192]{0}', space=vmem, size = 0x2000, scoped, tag = 'input window, operand 2, single buffered']
    #allocation4 [shape = 's32[1]{0}', space=sflag, size = 0x4, scoped, tag = 'scoped memory for tpu_custom_call.1']
    %10 = vsyncpa [#allocation4], 0
    // Predicated region
    $region2: #{tpu_custom_call.1} parent=1 // pred_check
      _
    $region3: #{tpu_custom_call.1} parent=1 // pred_check_branch
      %12 = sbr.rel (0) target = $region5
    $region4: #{tpu_custom_call.1} parent=1 // pred_region
      _
    $region5: #{tpu_custom_call.1} parent=1 // pred_fallthru
      _
    // Predicated region
    $region6: #{tpu_custom_call.1} parent=1 // pred_check
      _
    $region7: #{tpu_custom_call.1} parent=1 // pred_check_branch
      %14 = sbr.rel (0) target = $region9
    $region8: #{tpu_custom_call.1} parent=1 // pred_region
      _
    $region9: #{tpu_custom_call.1} parent=1 // pred_fallthru
      _
    // Predicated region
    $region10: #{tpu_custom_call.1} parent=1 // pred_check
      _
    $region11: #{tpu_custom_call.1} parent=1 // pred_check_branch
      %16 = sbr.rel (0) target = $region13
    $region12: #{tpu_custom_call.1} parent=1 // pred_region
      %18 = vsyncadd [#allocation4], 0
      %s20 = sshll.u32 %s2, 4
      %s21 = int_to_ptr.hbm [resolvable:$true] %s20
      %s22 = sshll.u32 [#allocation3], 4
      %s23 = int_to_ptr.vmem [resolvable:$true] %s22
      %25 = dma.hbm_to_vmem [thread:$0]  %s21, 256, %s23, [#allocation4]
    $region13: #{tpu_custom_call.1} parent=1 // pred_fallthru
      _
    // Predicated region
    $region14: #{tpu_custom_call.1} parent=1 // pred_check
      _
    $region15: #{tpu_custom_call.1} parent=1 // pred_check_branch
      %27 = sbr.rel (0) target = $region17
    $region16: #{tpu_custom_call.1} parent=1 // pred_region
      _
    $region17: #{tpu_custom_call.1} parent=1 // pred_fallthru
      _
    // Predicated region
    $region18: #{tpu_custom_call.1} parent=1 // pred_check
      _
    $region19: #{tpu_custom_call.1} parent=1 // pred_check_branch
      %29 = sbr.rel (0) target = $region21
    $region20: #{tpu_custom_call.1} parent=1 // pred_region
      %31 = dma.done [#allocation4], 256
    $region21: #{tpu_custom_call.1} parent=1 // pred_fallthru
      _
    %v33 = vld [vmem:[#allocation3] ss:$4 sm:$0xf]
    %s34 = scalar_lea.vmem [#allocation3], 1
    %v35 = vld [vmem:[%s34] ss:$4 sm:$0xf]
    %s36 = scalar_lea.vmem [#allocation3], 2
    %v37 = vld [vmem:[%s36] ss:$4 sm:$0xf]
    %s38 = scalar_lea.vmem [#allocation3], 3
    %v39 = vld [vmem:[%s38] ss:$4 sm:$0xf]
    %v40 = vld [vmem:[%s0] sm:$0xf]
    %v41 = vld [vmem:[%s0 + $0x4] sm:$0xf]
    %v42 = vld [vmem:[%s0 + $0x8] sm:$0xf]
    %v43 = vld [vmem:[%s0 + $0xc] sm:$0xf]
    %v44 = vld [vmem:[%s0 + $0x10] sm:$0xf]
    %v45 = vld [vmem:[%s0 + $0x14] sm:$0xf]
    %v46 = vld [vmem:[%s0 + $0x18] sm:$0xf]
    %v47 = vld [vmem:[%s0 + $0x1c] sm:$0xf]
    %v48 = vld [vmem:[%s1] sm:$0xff]
    %v49 = vld [vmem:[%s1 + $0x8] sm:$0xff]
    %v50 = vld [vmem:[%s1 + $0x10] sm:$0xff]
    %v51 = vld [vmem:[%s1 + $0x18] sm:$0xff]
    %v53 = vperm.slane %v33, 0
    %v54 = vperm.slane %v33, 1
    %v55 = vperm.slane %v33, 2
    %v56 = vperm.slane %v33, 3
    %v69 = vunpack.c.l.b16 %v40
    %v70 = vunpack.c.l.b16 %v41
    %v71 = vunpack.c.l.b16 %v42
    %v72 = vunpack.c.l.b16 %v43
    %v73 = vunpack.c.l.b16 %v44
    %v74 = vunpack.c.l.b16 %v45
    %v75 = vunpack.c.l.b16 %v46
    %v76 = vunpack.c.l.b16 %v47
    %v77 = vpack.c.b16 %v70, %v69
    %v78 = vpack.c.b16 %v72, %v71
    %v79 = vpack.c.b16 %v74, %v73
    %v80 = vpack.c.b16 %v76, %v75
    %v85 = vunpack.c.l.b16 %v48
    %v86 = vunpack.c.h.b16 %v48
    %v87 = vunpack.c.l.b16 %v49
    %v88 = vunpack.c.h.b16 %v49
    %v89 = vunpack.c.l.b16 %v50
    %v90 = vunpack.c.h.b16 %v50
    %v91 = vunpack.c.l.b16 %v51
    %v92 = vunpack.c.h.b16 %v51
    %v93 = vpack.c.b16 %v89, %v85
    %v94 = vpack.c.b16 %v90, %v86
    %v95 = vpack.c.b16 %v91, %v87
    %v96 = vpack.c.b16 %v92, %v88
    %vm101 = vcmask 130048
    %v103 = vsel %vm101, %v77, 0
    %v106 = vsel %vm101, %v78, 0
    %v109 = vsel %vm101, %v79, 0
    %v112 = vsel %vm101, %v80, 0
    %114 = vmatpush.bf16.msra.mxu0 0
    %115 = vmatpush.bf16.msra.mxu0 0
    %116 = vmatpush.bf16.msra.mxu0 0
    %117 = vmatpush.bf16.msra.mxu0 0
    %118 = vmatpush.bf16.msra.mxu0 0
    %119 = vmatpush.bf16.msra.mxu0 0
    %120 = vmatpush.bf16.msra.mxu0 0
    %121 = vmatpush.bf16.msra.mxu0 %v93
    %122 = vmatmul.bf16.gmra.mxu0 %v103
    %v123 = vpop.f32.mrf.mxu0
    %v124 = vadd.f32 %v53, %v123
    %v125 = vpop.f32.mrf.mxu0
    %v126 = vadd.f32 %v53, %v125
    %127 = vmatmul.bf16.gmra.mxu0 %v106
    %v128 = vpop.f32.mrf.mxu0
    %v129 = vadd.f32 %v53, %v128
    %v130 = vpop.f32.mrf.mxu0
    %v131 = vadd.f32 %v53, %v130
    %132 = vmatmul.bf16.gmra.mxu0 %v109
    %v133 = vpop.f32.mrf.mxu0
    %v134 = vadd.f32 %v53, %v133
    %v135 = vpop.f32.mrf.mxu0
    %v136 = vadd.f32 %v53, %v135
    %137 = vmatmul.bf16.gmra.mxu0 %v112
    %v138 = vpop.f32.mrf.mxu0
    %v139 = vadd.f32 %v53, %v138
    %v140 = vpop.f32.mrf.mxu0
    %v141 = vadd.f32 %v53, %v140
    %142 = vdwg.mxu0
    %143 = vmatpush.bf16.msra.mxu0 0
    %144 = vmatpush.bf16.msra.mxu0 0
    %145 = vmatpush.bf16.msra.mxu0 0
    %146 = vmatpush.bf16.msra.mxu0 0
    %147 = vmatpush.bf16.msra.mxu0 0
    %148 = vmatpush.bf16.msra.mxu0 0
    %149 = vmatpush.bf16.msra.mxu0 0
    %150 = vmatpush.bf16.msra.mxu0 %v94
    %151 = vmatmul.bf16.gmra.mxu0 %v103
    %v152 = vpop.f32.mrf.mxu0
    %v153 = vadd.f32 %v54, %v152
    %v154 = vpop.f32.mrf.mxu0
    %v155 = vadd.f32 %v54, %v154
    %156 = vmatmul.bf16.gmra.mxu0 %v106
    %v157 = vpop.f32.mrf.mxu0
    %v158 = vadd.f32 %v54, %v157
    %v159 = vpop.f32.mrf.mxu0
    %v160 = vadd.f32 %v54, %v159
    %161 = vmatmul.bf16.gmra.mxu0 %v109
    %v162 = vpop.f32.mrf.mxu0
    %v163 = vadd.f32 %v54, %v162
    %v164 = vpop.f32.mrf.mxu0
    %v165 = vadd.f32 %v54, %v164
    %166 = vmatmul.bf16.gmra.mxu0 %v112
    %v167 = vpop.f32.mrf.mxu0
    %v168 = vadd.f32 %v54, %v167
    %v169 = vpop.f32.mrf.mxu0
    %v170 = vadd.f32 %v54, %v169
    %171 = vdwg.mxu0
    %172 = vmatpush.bf16.msra.mxu0 0
    %173 = vmatpush.bf16.msra.mxu0 0
    %174 = vmatpush.bf16.msra.mxu0 0
    %175 = vmatpush.bf16.msra.mxu0 0
    %176 = vmatpush.bf16.msra.mxu0 0
    %177 = vmatpush.bf16.msra.mxu0 0
    %178 = vmatpush.bf16.msra.mxu0 0
    %179 = vmatpush.bf16.msra.mxu0 %v95
    %180 = vmatmul.bf16.gmra.mxu0 %v103
    %v181 = vpop.f32.mrf.mxu0
    %v182 = vadd.f32 %v55, %v181
    %v183 = vpop.f32.mrf.mxu0
    %v184 = vadd.f32 %v55, %v183
    %185 = vmatmul.bf16.gmra.mxu0 %v106
    %v186 = vpop.f32.mrf.mxu0
    %v187 = vadd.f32 %v55, %v186
    %v188 = vpop.f32.mrf.mxu0
    %v189 = vadd.f32 %v55, %v188
    %190 = vmatmul.bf16.gmra.mxu0 %v109
    %v191 = vpop.f32.mrf.mxu0
    %v192 = vadd.f32 %v55, %v191
    %v193 = vpop.f32.mrf.mxu0
    %v194 = vadd.f32 %v55, %v193
    %195 = vmatmul.bf16.gmra.mxu0 %v112
    %v196 = vpop.f32.mrf.mxu0
    %v197 = vadd.f32 %v55, %v196
    %v198 = vpop.f32.mrf.mxu0
    %v199 = vadd.f32 %v55, %v198
    %200 = vdwg.mxu0
    %201 = vmatpush.bf16.msra.mxu0 0
    %202 = vmatpush.bf16.msra.mxu0 0
    %203 = vmatpush.bf16.msra.mxu0 0
    %204 = vmatpush.bf16.msra.mxu0 0
    %205 = vmatpush.bf16.msra.mxu0 0
    %206 = vmatpush.bf16.msra.mxu0 0
    %207 = vmatpush.bf16.msra.mxu0 0
    %208 = vmatpush.bf16.msra.mxu0 %v96
    %209 = vmatmul.bf16.gmra.mxu0 %v103
    %v210 = vpop.f32.mrf.mxu0
    %v211 = vadd.f32 %v56, %v210
    %v212 = vpop.f32.mrf.mxu0
    %v213 = vadd.f32 %v56, %v212
    %214 = vmatmul.bf16.gmra.mxu0 %v106
    %v215 = vpop.f32.mrf.mxu0
    %v216 = vadd.f32 %v56, %v215
    %v217 = vpop.f32.mrf.mxu0
    %v218 = vadd.f32 %v56, %v217
    %219 = vmatmul.bf16.gmra.mxu0 %v109
    %v220 = vpop.f32.mrf.mxu0
    %v221 = vadd.f32 %v56, %v220
    %v222 = vpop.f32.mrf.mxu0
    %v223 = vadd.f32 %v56, %v222
    %224 = vmatmul.bf16.gmra.mxu0 %v112
    %v225 = vpop.f32.mrf.mxu0
    %v226 = vadd.f32 %v56, %v225
    %v227 = vpop.f32.mrf.mxu0
    %v228 = vadd.f32 %v56, %v227
    %229 = vdwg.mxu0
    %v230 = vadd.f32 %v124, %v153
    %v231 = vadd.f32 %v230, %v182
    %v232 = vadd.f32 %v231, %v211
    %233 = vadd.xlane.f32.xlu0 %v232
    %v234 = vpop.xlane.xlu0 %233
    %v235 = vadd.f32 %v126, %v155
    %v236 = vadd.f32 %v235, %v184
    %v237 = vadd.f32 %v236, %v213
    %238 = vadd.xlane.f32.xlu0 %v237
    %v239 = vpop.xlane.xlu0 %238
    %v240 = vadd.f32 %v129, %v158
    %v241 = vadd.f32 %v240, %v187
    %v242 = vadd.f32 %v241, %v216
    %243 = vadd.xlane.f32.xlu0 %v242
    %v244 = vpop.xlane.xlu0 %243
    %v245 = vadd.f32 %v131, %v160
    %v246 = vadd.f32 %v245, %v189
    %v247 = vadd.f32 %v246, %v218
    %248 = vadd.xlane.f32.xlu0 %v247
    %v249 = vpop.xlane.xlu0 %248
    %v250 = vadd.f32 %v134, %v163
    %v251 = vadd.f32 %v250, %v192
    %v252 = vadd.f32 %v251, %v221
    %253 = vadd.xlane.f32.xlu0 %v252
    %v254 = vpop.xlane.xlu0 %253
    %v255 = vadd.f32 %v136, %v165
    %v256 = vadd.f32 %v255, %v194
    %v257 = vadd.f32 %v256, %v223
    %258 = vadd.xlane.f32.xlu0 %v257
    %v259 = vpop.xlane.xlu0 %258
    %v260 = vadd.f32 %v139, %v168
    %v261 = vadd.f32 %v260, %v197
    %v262 = vadd.f32 %v261, %v226
    %263 = vadd.xlane.f32.xlu0 %v262
    %v264 = vpop.xlane.xlu0 %263
    %v265 = vadd.f32 %v141, %v170
    %v266 = vadd.f32 %v265, %v199
    %v267 = vadd.f32 %v266, %v228
    %268 = vadd.xlane.f32.xlu0 %v267
    %v269 = vpop.xlane.xlu0 %268
    %v270 = vmul.f32 %v124, %v124
    %v271 = vmul.f32 %v153, %v153
    %v272 = vmul.f32 %v182, %v182
    %v273 = vmul.f32 %v211, %v211
    %v274 = vmul.f32 %v126, %v126
    %v275 = vmul.f32 %v155, %v155
    %v276 = vmul.f32 %v184, %v184
    %v277 = vmul.f32 %v213, %v213
    %v278 = vmul.f32 %v129, %v129
    %v279 = vmul.f32 %v158, %v158
    %v280 = vmul.f32 %v187, %v187
    %v281 = vmul.f32 %v216, %v216
    %v282 = vmul.f32 %v131, %v131
    %v283 = vmul.f32 %v160, %v160
    %v284 = vmul.f32 %v189, %v189
    %v285 = vmul.f32 %v218, %v218
    %v286 = vmul.f32 %v134, %v134
    %v287 = vmul.f32 %v163, %v163
    %v288 = vmul.f32 %v192, %v192
    %v289 = vmul.f32 %v221, %v221
    %v290 = vmul.f32 %v136, %v136
    %v291 = vmul.f32 %v165, %v165
    %v292 = vmul.f32 %v194, %v194
    %v293 = vmul.f32 %v223, %v223
    %v294 = vmul.f32 %v139, %v139
    %v295 = vmul.f32 %v168, %v168
    %v296 = vmul.f32 %v197, %v197
    %v297 = vmul.f32 %v226, %v226
    %v298 = vmul.f32 %v141, %v141
    %v299 = vmul.f32 %v170, %v170
    %v300 = vmul.f32 %v199, %v199
    %v301 = vmul.f32 %v228, %v228
    %v302 = vadd.f32 %v270, %v271
    %v303 = vadd.f32 %v302, %v272
    %v304 = vadd.f32 %v303, %v273
    %305 = vadd.xlane.f32.xlu0 %v304
    %v306 = vpop.xlane.xlu0 %305
    %v307 = vadd.f32 %v274, %v275
    %v308 = vadd.f32 %v307, %v276
    %v309 = vadd.f32 %v308, %v277
    %310 = vadd.xlane.f32.xlu0 %v309
    %v311 = vpop.xlane.xlu0 %310
    %v312 = vadd.f32 %v278, %v279
    %v313 = vadd.f32 %v312, %v280
    %v314 = vadd.f32 %v313, %v281
    %315 = vadd.xlane.f32.xlu0 %v314
    %v316 = vpop.xlane.xlu0 %315
    %v317 = vadd.f32 %v282, %v283
    %v318 = vadd.f32 %v317, %v284
    %v319 = vadd.f32 %v318, %v285
    %320 = vadd.xlane.f32.xlu0 %v319
    %v321 = vpop.xlane.xlu0 %320
    %v322 = vadd.f32 %v286, %v287
    %v323 = vadd.f32 %v322, %v288
    %v324 = vadd.f32 %v323, %v289
    %325 = vadd.xlane.f32.xlu0 %v324
    %v326 = vpop.xlane.xlu0 %325
    %v327 = vadd.f32 %v290, %v291
    %v328 = vadd.f32 %v327, %v292
    %v329 = vadd.f32 %v328, %v293
    %330 = vadd.xlane.f32.xlu0 %v329
    %v331 = vpop.xlane.xlu0 %330
    %v332 = vadd.f32 %v294, %v295
    %v333 = vadd.f32 %v332, %v296
    %v334 = vadd.f32 %v333, %v297
    %335 = vadd.xlane.f32.xlu0 %v334
    %v336 = vpop.xlane.xlu0 %335
    %v337 = vadd.f32 %v298, %v299
    %v338 = vadd.f32 %v337, %v300
    %v339 = vadd.f32 %v338, %v301
    %340 = vadd.xlane.f32.xlu0 %v339
    %v341 = vpop.xlane.xlu0 %340
    %v342 = vmul.f32 %v234, 0.001953125
    %v343 = vmul.f32 %v239, 0.001953125
    %v344 = vmul.f32 %v244, 0.001953125
    %v345 = vmul.f32 %v249, 0.001953125
    %v346 = vmul.f32 %v254, 0.001953125
    %v347 = vmul.f32 %v259, 0.001953125
    %v348 = vmul.f32 %v264, 0.001953125
    %v349 = vmul.f32 %v269, 0.001953125
    %v350 = vmul.f32 %v306, 0.001953125
    %v351 = vmul.f32 %v311, 0.001953125
    %v352 = vmul.f32 %v316, 0.001953125
    %v353 = vmul.f32 %v321, 0.001953125
    %v354 = vmul.f32 %v326, 0.001953125
    %v355 = vmul.f32 %v331, 0.001953125
    %v356 = vmul.f32 %v336, 0.001953125
    %v357 = vmul.f32 %v341, 0.001953125
    %v358 = vmul.f32 %v342, %v342
    %v359 = vmul.f32 %v343, %v343
    %v360 = vmul.f32 %v344, %v344
    %v361 = vmul.f32 %v345, %v345
    %v362 = vmul.f32 %v346, %v346
    %v363 = vmul.f32 %v347, %v347
    %v364 = vmul.f32 %v348, %v348
    %v365 = vmul.f32 %v349, %v349
    %v366 = vsub.f32 %v350, %v358
    %v367 = vsub.f32 %v351, %v359
    %v368 = vsub.f32 %v352, %v360
    %v369 = vsub.f32 %v353, %v361
    %v370 = vsub.f32 %v354, %v362
    %v371 = vsub.f32 %v355, %v363
    %v372 = vsub.f32 %v356, %v364
    %v373 = vsub.f32 %v357, %v365
    %v374 = vmax.f32 %v366, 0.0
    %v375 = vmax.f32 %v367, 0.0
    %v376 = vmax.f32 %v368, 0.0
    %v377 = vmax.f32 %v369, 0.0
    %v378 = vmax.f32 %v370, 0.0
    %v379 = vmax.f32 %v371, 0.0
    %v380 = vmax.f32 %v372, 0.0
    %v381 = vmax.f32 %v373, 0.0
    %v382 = vsub.f32 %v124, %v342
    %v383 = vsub.f32 %v153, %v342
    %v384 = vsub.f32 %v182, %v342
    %v385 = vsub.f32 %v211, %v342
    %v386 = vsub.f32 %v126, %v343
    %v387 = vsub.f32 %v155, %v343
    %v388 = vsub.f32 %v184, %v343
    %v389 = vsub.f32 %v213, %v343
    %v390 = vsub.f32 %v129, %v344
    %v391 = vsub.f32 %v158, %v344
    %v392 = vsub.f32 %v187, %v344
    %v393 = vsub.f32 %v216, %v344
    %v394 = vsub.f32 %v131, %v345
    %v395 = vsub.f32 %v160, %v345
    %v396 = vsub.f32 %v189, %v345
    %v397 = vsub.f32 %v218, %v345
    %v398 = vsub.f32 %v134, %v346
    %v399 = vsub.f32 %v163, %v346
    %v400 = vsub.f32 %v192, %v346
    %v401 = vsub.f32 %v221, %v346
    %v402 = vsub.f32 %v136, %v347
    %v403 = vsub.f32 %v165, %v347
    %v404 = vsub.f32 %v194, %v347
    %v405 = vsub.f32 %v223, %v347
    %v406 = vsub.f32 %v139, %v348
    %v407 = vsub.f32 %v168, %v348
    %v408 = vsub.f32 %v197, %v348
    %v409 = vsub.f32 %v226, %v348
    %v410 = vsub.f32 %v141, %v349
    %v411 = vsub.f32 %v170, %v349
    %v412 = vsub.f32 %v199, %v349
    %v413 = vsub.f32 %v228, %v349
    %v414 = vadd.f32 %v374, 1e-05
    %v415 = vadd.f32 %v375, 1e-05
    %v416 = vadd.f32 %v376, 1e-05
    %v417 = vadd.f32 %v377, 1e-05
    %v418 = vadd.f32 %v378, 1e-05
    %v419 = vadd.f32 %v379, 1e-05
    %v420 = vadd.f32 %v380, 1e-05
    %v421 = vadd.f32 %v381, 1e-05
    %v422 = vrsqrt.pop %v414
    %v423 = vmul.f32 %v422, %v414
    %v424 = vmul.f32 %v423, %v422
    %v425 = vmul.f32 0.5, %v424
    %v426 = vsub.f32 1.5, %v425
    %v427 = vmul.f32 %v422, %v426
    %vm428 = vweird.f32 %v414
    %vm429 = vweird.f32 %v422
    %vm430 = vmor %vm428, %vm429
    %v431 = vsel %vm430, %v422, %v427
    %v432 = vrsqrt.pop %v415
    %v433 = vmul.f32 %v432, %v415
    %v434 = vmul.f32 %v433, %v432
    %v435 = vmul.f32 0.5, %v434
    %v436 = vsub.f32 1.5, %v435
    %v437 = vmul.f32 %v432, %v436
    %vm438 = vweird.f32 %v415
    %vm439 = vweird.f32 %v432
    %vm440 = vmor %vm438, %vm439
    %v441 = vsel %vm440, %v432, %v437
    %v442 = vrsqrt.pop %v416
    %v443 = vmul.f32 %v442, %v416
    %v444 = vmul.f32 %v443, %v442
    %v445 = vmul.f32 0.5, %v444
    %v446 = vsub.f32 1.5, %v445
    %v447 = vmul.f32 %v442, %v446
    %vm448 = vweird.f32 %v416
    %vm449 = vweird.f32 %v442
    %vm450 = vmor %vm448, %vm449
    %v451 = vsel %vm450, %v442, %v447
    %v452 = vrsqrt.pop %v417
    %v453 = vmul.f32 %v452, %v417
    %v454 = vmul.f32 %v453, %v452
    %v455 = vmul.f32 0.5, %v454
    %v456 = vsub.f32 1.5, %v455
    %v457 = vmul.f32 %v452, %v456
    %vm458 = vweird.f32 %v417
    %vm459 = vweird.f32 %v452
    %vm460 = vmor %vm458, %vm459
    %v461 = vsel %vm460, %v452, %v457
    %v462 = vrsqrt.pop %v418
    %v463 = vmul.f32 %v462, %v418
    %v464 = vmul.f32 %v463, %v462
    %v465 = vmul.f32 0.5, %v464
    %v466 = vsub.f32 1.5, %v465
    %v467 = vmul.f32 %v462, %v466
    %vm468 = vweird.f32 %v418
    %vm469 = vweird.f32 %v462
    %vm470 = vmor %vm468, %vm469
    %v471 = vsel %vm470, %v462, %v467
    %v472 = vrsqrt.pop %v419
    %v473 = vmul.f32 %v472, %v419
    %v474 = vmul.f32 %v473, %v472
    %v475 = vmul.f32 0.5, %v474
    %v476 = vsub.f32 1.5, %v475
    %v477 = vmul.f32 %v472, %v476
    %vm478 = vweird.f32 %v419
    %vm479 = vweird.f32 %v472
    %vm480 = vmor %vm478, %vm479
    %v481 = vsel %vm480, %v472, %v477
    %v482 = vrsqrt.pop %v420
    %v483 = vmul.f32 %v482, %v420
    %v484 = vmul.f32 %v483, %v482
    %v485 = vmul.f32 0.5, %v484
    %v486 = vsub.f32 1.5, %v485
    %v487 = vmul.f32 %v482, %v486
    %vm488 = vweird.f32 %v420
    %vm489 = vweird.f32 %v482
    %vm490 = vmor %vm488, %vm489
    %v491 = vsel %vm490, %v482, %v487
    %v492 = vrsqrt.pop %v421
    %v493 = vmul.f32 %v492, %v421
    %v494 = vmul.f32 %v493, %v492
    %v495 = vmul.f32 0.5, %v494
    %v496 = vsub.f32 1.5, %v495
    %v497 = vmul.f32 %v492, %v496
    %vm498 = vweird.f32 %v421
    %vm499 = vweird.f32 %v492
    %vm500 = vmor %vm498, %vm499
    %v501 = vsel %vm500, %v492, %v497
    %v502 = vmul.f32 %v382, %v431
    %v503 = vmul.f32 %v383, %v431
    %v504 = vmul.f32 %v384, %v431
    %v505 = vmul.f32 %v385, %v431
    %v506 = vmul.f32 %v386, %v441
    %v507 = vmul.f32 %v387, %v441
    %v508 = vmul.f32 %v388, %v441
    %v509 = vmul.f32 %v389, %v441
    %v510 = vmul.f32 %v390, %v451
    %v511 = vmul.f32 %v391, %v451
    %v512 = vmul.f32 %v392, %v451
    %v513 = vmul.f32 %v393, %v451
    %v514 = vmul.f32 %v394, %v461
    %v515 = vmul.f32 %v395, %v461
    %v516 = vmul.f32 %v396, %v461
    %v517 = vmul.f32 %v397, %v461
    %v518 = vmul.f32 %v398, %v471
    %v519 = vmul.f32 %v399, %v471
    %v520 = vmul.f32 %v400, %v471
    %v521 = vmul.f32 %v401, %v471
    %v522 = vmul.f32 %v402, %v481
    %v523 = vmul.f32 %v403, %v481
    %v524 = vmul.f32 %v404, %v481
    %v525 = vmul.f32 %v405, %v481
    %v526 = vmul.f32 %v406, %v491
    %v527 = vmul.f32 %v407, %v491
    %v528 = vmul.f32 %v408, %v491
    %v529 = vmul.f32 %v409, %v491
    %v530 = vmul.f32 %v410, %v501
    %v531 = vmul.f32 %v411, %v501
    %v532 = vmul.f32 %v412, %v501
    %v533 = vmul.f32 %v413, %v501
    %v535 = vperm.slane %v35, 0
    %v536 = vperm.slane %v35, 1
    %v537 = vperm.slane %v35, 2
    %v538 = vperm.slane %v35, 3
    %v543 = vmul.f32 %v502, %v535
    %v544 = vmul.f32 %v503, %v536
    %v545 = vmul.f32 %v504, %v537
    %v546 = vmul.f32 %v505, %v538
    %v547 = vmul.f32 %v506, %v535
    %v548 = vmul.f32 %v507, %v536
    %v549 = vmul.f32 %v508, %v537
    %v550 = vmul.f32 %v509, %v538
    %v551 = vmul.f32 %v510, %v535
    %v552 = vmul.f32 %v511, %v536
    %v553 = vmul.f32 %v512, %v537
    %v554 = vmul.f32 %v513, %v538
    %v555 = vmul.f32 %v514, %v535
    %v556 = vmul.f32 %v515, %v536
    %v557 = vmul.f32 %v516, %v537
    %v558 = vmul.f32 %v517, %v538
    %v559 = vmul.f32 %v518, %v535
    %v560 = vmul.f32 %v519, %v536
    %v561 = vmul.f32 %v520, %v537
    %v562 = vmul.f32 %v521, %v538
    %v563 = vmul.f32 %v522, %v535
    %v564 = vmul.f32 %v523, %v536
    %v565 = vmul.f32 %v524, %v537
    %v566 = vmul.f32 %v525, %v538
    %v567 = vmul.f32 %v526, %v535
    %v568 = vmul.f32 %v527, %v536
    %v569 = vmul.f32 %v528, %v537
    %v570 = vmul.f32 %v529, %v538
    %v571 = vmul.f32 %v530, %v535
    %v572 = vmul.f32 %v531, %v536
    %v573 = vmul.f32 %v532, %v537
    %v574 = vmul.f32 %v533, %v538
    %v576 = vperm.slane %v37, 0
    %v577 = vperm.slane %v37, 1
    %v578 = vperm.slane %v37, 2
    %v579 = vperm.slane %v37, 3
    %v584 = vadd.f32 %v543, %v576
    %v585 = vadd.f32 %v544, %v577
    %v586 = vadd.f32 %v545, %v578
    %v587 = vadd.f32 %v546, %v579
    %v588 = vadd.f32 %v547, %v576
    %v589 = vadd.f32 %v548, %v577
    %v590 = vadd.f32 %v549, %v578
    %v591 = vadd.f32 %v550, %v579
    %v592 = vadd.f32 %v551, %v576
    %v593 = vadd.f32 %v552, %v577
    %v594 = vadd.f32 %v553, %v578
    %v595 = vadd.f32 %v554, %v579
    %v596 = vadd.f32 %v555, %v576
    %v597 = vadd.f32 %v556, %v577
    %v598 = vadd.f32 %v557, %v578
    %v599 = vadd.f32 %v558, %v579
    %v600 = vadd.f32 %v559, %v576
    %v601 = vadd.f32 %v560, %v577
    %v602 = vadd.f32 %v561, %v578
    %v603 = vadd.f32 %v562, %v579
    %v604 = vadd.f32 %v563, %v576
    %v605 = vadd.f32 %v564, %v577
    %v606 = vadd.f32 %v565, %v578
    %v607 = vadd.f32 %v566, %v579
    %v608 = vadd.f32 %v567, %v576
    %v609 = vadd.f32 %v568, %v577
    %v610 = vadd.f32 %v569, %v578
    %v611 = vadd.f32 %v570, %v579
    %v612 = vadd.f32 %v571, %v576
    %v613 = vadd.f32 %v572, %v577
    %v614 = vadd.f32 %v573, %v578
    %v615 = vadd.f32 %v574, %v579
    %v616 = vmax.f32 %v584, 0.0
    %v617 = vmax.f32 %v585, 0.0
    %v618 = vmax.f32 %v586, 0.0
    %v619 = vmax.f32 %v587, 0.0
    %v620 = vmax.f32 %v588, 0.0
    %v621 = vmax.f32 %v589, 0.0
    %v622 = vmax.f32 %v590, 0.0
    %v623 = vmax.f32 %v591, 0.0
    %v624 = vmax.f32 %v592, 0.0
    %v625 = vmax.f32 %v593, 0.0
    %v626 = vmax.f32 %v594, 0.0
    %v627 = vmax.f32 %v595, 0.0
    %v628 = vmax.f32 %v596, 0.0
    %v629 = vmax.f32 %v597, 0.0
    %v630 = vmax.f32 %v598, 0.0
    %v631 = vmax.f32 %v599, 0.0
    %v632 = vmax.f32 %v600, 0.0
    %v633 = vmax.f32 %v601, 0.0
    %v634 = vmax.f32 %v602, 0.0
    %v635 = vmax.f32 %v603, 0.0
    %v636 = vmax.f32 %v604, 0.0
    %v637 = vmax.f32 %v605, 0.0
    %v638 = vmax.f32 %v606, 0.0
    %v639 = vmax.f32 %v607, 0.0
    %v640 = vmax.f32 %v608, 0.0
    %v641 = vmax.f32 %v609, 0.0
    %v642 = vmax.f32 %v610, 0.0
    %v643 = vmax.f32 %v611, 0.0
    %v644 = vmax.f32 %v612, 0.0
    %v645 = vmax.f32 %v613, 0.0
    %v646 = vmax.f32 %v614, 0.0
    %v647 = vmax.f32 %v615, 0.0
    %v649 = vperm.slane %v39, 0
    %v650 = vperm.slane %v39, 1
    %v651 = vperm.slane %v39, 2
    %v652 = vperm.slane %v39, 3
    %v657 = vmul.f32 %v616, %v649
    %v658 = vmul.f32 %v617, %v650
    %v659 = vmul.f32 %v618, %v651
    %v660 = vmul.f32 %v619, %v652
    %v661 = vmul.f32 %v620, %v649
    %v662 = vmul.f32 %v621, %v650
    %v663 = vmul.f32 %v622, %v651
    %v664 = vmul.f32 %v623, %v652
    %v665 = vmul.f32 %v624, %v649
    %v666 = vmul.f32 %v625, %v650
    %v667 = vmul.f32 %v626, %v651
    %v668 = vmul.f32 %v627, %v652
    %v669 = vmul.f32 %v628, %v649
    %v670 = vmul.f32 %v629, %v650
    %v671 = vmul.f32 %v630, %v651
    %v672 = vmul.f32 %v631, %v652
    %v673 = vmul.f32 %v632, %v649
    %v674 = vmul.f32 %v633, %v650
    %v675 = vmul.f32 %v634, %v651
    %v676 = vmul.f32 %v635, %v652
    %v677 = vmul.f32 %v636, %v649
    %v678 = vmul.f32 %v637, %v650
    %v679 = vmul.f32 %v638, %v651
    %v680 = vmul.f32 %v639, %v652
    %v681 = vmul.f32 %v640, %v649
    %v682 = vmul.f32 %v641, %v650
    %v683 = vmul.f32 %v642, %v651
    %v684 = vmul.f32 %v643, %v652
    %v685 = vmul.f32 %v644, %v649
    %v686 = vmul.f32 %v645, %v650
    %v687 = vmul.f32 %v646, %v651
    %v688 = vmul.f32 %v647, %v652
    %v689 = vadd.f32 %v657, %v658
    %v690 = vadd.f32 %v689, %v659
    %v691 = vadd.f32 %v690, %v660
    %692 = vadd.xlane.f32.xlu0 %v691
    %v693 = vpop.xlane.xlu0 %692
    %v694 = vadd.f32 %v661, %v662
    %v695 = vadd.f32 %v694, %v663
    %v696 = vadd.f32 %v695, %v664
    %697 = vadd.xlane.f32.xlu0 %v696
    %v698 = vpop.xlane.xlu0 %697
    %v699 = vadd.f32 %v665, %v666
    %v700 = vadd.f32 %v699, %v667
    %v701 = vadd.f32 %v700, %v668
    %702 = vadd.xlane.f32.xlu0 %v701
    %v703 = vpop.xlane.xlu0 %702
    %v704 = vadd.f32 %v669, %v670
    %v705 = vadd.f32 %v704, %v671
    %v706 = vadd.f32 %v705, %v672
    %707 = vadd.xlane.f32.xlu0 %v706
    %v708 = vpop.xlane.xlu0 %707
    %v709 = vadd.f32 %v673, %v674
    %v710 = vadd.f32 %v709, %v675
    %v711 = vadd.f32 %v710, %v676
    %712 = vadd.xlane.f32.xlu0 %v711
    %v713 = vpop.xlane.xlu0 %712
    %v714 = vadd.f32 %v677, %v678
    %v715 = vadd.f32 %v714, %v679
    %v716 = vadd.f32 %v715, %v680
    %717 = vadd.xlane.f32.xlu0 %v716
    %v718 = vpop.xlane.xlu0 %717
    %v719 = vadd.f32 %v681, %v682
    %v720 = vadd.f32 %v719, %v683
    %v721 = vadd.f32 %v720, %v684
    %722 = vadd.xlane.f32.xlu0 %v721
    %v723 = vpop.xlane.xlu0 %722
    %v724 = vadd.f32 %v685, %v686
    %v725 = vadd.f32 %v724, %v687
    %v726 = vadd.f32 %v725, %v688
    %727 = vadd.xlane.f32.xlu0 %v726
    %v728 = vpop.xlane.xlu0 %727
    %s729 = sld [smem:[#allocation2]]
    %v730 = vstv %s729
    %v731 = vadd.f32 %v693, %v730
    %v732 = vadd.f32 %v698, %v730
    %v733 = vadd.f32 %v703, %v730
    %v734 = vadd.f32 %v708, %v730
    %v735 = vadd.f32 %v713, %v730
    %v736 = vadd.f32 %v718, %v730
    %v737 = vadd.f32 %v723, %v730
    %v738 = vadd.f32 %v728, %v730
    %vm739 = vcmask 7168
    %740 = vst.msk [vmem:[%s4] sm:$0xff] %vm739, %v731
    %741 = vst.msk [vmem:[%s4 + $0x8] sm:$0xff] %vm739, %v732
    %742 = vst.msk [vmem:[%s4 + $0x10] sm:$0xff] %vm739, %v733
    %743 = vst.msk [vmem:[%s4 + $0x18] sm:$0xff] %vm739, %v734
    %744 = vst.msk [vmem:[%s4 + $0x20] sm:$0xff] %vm739, %v735
    %745 = vst.msk [vmem:[%s4 + $0x28] sm:$0xff] %vm739, %v736
    %746 = vst.msk [vmem:[%s4 + $0x30] sm:$0xff] %vm739, %v737
    %747 = vst.msk [vmem:[%s4 + $0x38] sm:$0xff] %vm739, %v738
    // Predicated region
    $region22: #{tpu_custom_call.1} parent=1 // pred_check
      _
    $region23: #{tpu_custom_call.1} parent=1 // pred_check_branch
      %749 = sbr.rel (0) target = $region25
    $region24: #{tpu_custom_call.1} parent=1 // pred_region
      _
    $region25: #{tpu_custom_call.1} parent=1 // pred_fallthru
      _
    // Predicated region
    $region26: #{tpu_custom_call.1} parent=1 // pred_check
      _
    $region27: #{tpu_custom_call.1} parent=1 // pred_check_branch
      %751 = sbr.rel (0) target = $region29
    $region28: #{tpu_custom_call.1} parent=1 // pred_region
      _
    $region29: #{tpu_custom_call.1} parent=1 // pred_fallthru
      _
    %752 = vsyncpa [#allocation4], 1

</llo_original>
